<compile_context>
chip_gen: v6e
topology: v6e:2x2x1
jax: 0.10.0
libtpu: 0.0.40
codegen_flags: <defaults>
</compile_context>

<pallas_src>
import functools

import jax
import jax.numpy as jnp
from jax.experimental import pallas as pl
from jax.experimental.pallas import tpu as pltpu


def _round_up(v, m):
    return ((v + m - 1) // m) * m


def _vmem_config():
    """(A-row-tile byte budget, vmem_limit_bytes), per TPU generation."""
    try:
        vmem_cap = pltpu.get_tpu_info().vmem_capacity_bytes
    except Exception:
        vmem_cap = 64 * 1024 * 1024              # unknown chip -> be conservative
    if vmem_cap <= 64 * 1024 * 1024:             # v7x: 64 MiB per TensorCore
        return 16 * 1024 * 1024, 40 * 1024 * 1024
    return 40 * 1024 * 1024, 96 * 1024 * 1024    # v5e / v6e: 128 MiB VMEM


def _choose_tile(n, a_tile_budget_bytes, max_tile=1024):
    """Row-tile size (multiple of 32 for int8 sublane packing) and padded N.

    Keeps the double-buffered int8 A row tile (2 * tm * n_pad bytes) under the
    budget and guarantees >= 2 row tiles so the "parallel" grid actually
    double-buffers and can shard across v7x's two TensorCores."""
    n_min = _round_up(max(n, 64), 32)
    tm = max_tile
    while tm > 32 and 2 * tm * _round_up(n_min, tm) > a_tile_budget_bytes:
        tm //= 2
    tm = max(32, min(tm, n_min // 2))            # >= 2 grid steps
    return tm, _round_up(n_min, tm)


def _vmem_resident():
    """Whole-array VMEM-resident input: single buffer, copied in once."""
    return pl.BlockSpec(memory_space=pltpu.MemorySpace.VMEM)


# ----------------------------- Pallas kernels --------------------------------

def _layer1_kernel(tm, a_ref, x_full_ref, invdeg_ref, w1_ref, b1_ref, h1_ref):
    """SplineConv-1 (pseudo=0) + ReLU for one tile of node rows.

    h1 = relu( concat([(A @ x) * 1/deg, x], -1) @ vstack([W_k0, W_root]) + b )
    """
    i = pl.multiple_of(pl.program_id(0) * tm, tm)
    a = a_ref[...].astype(jnp.float32).astype(jnp.bfloat16)      # int8 0/1 -> bf16
    ax = jnp.dot(a, x_full_ref[...], preferred_element_type=jnp.float32)
    ax = ax * invdeg_ref[...]                                    # mean aggregation
    x_tile = x_full_ref[pl.ds(i, tm), :]                         # root-term rows
    cat = jnp.concatenate([ax.astype(jnp.bfloat16), x_tile], axis=-1)
    h1 = jnp.dot(cat, w1_ref[...], preferred_element_type=jnp.float32)
    h1_ref[...] = jnp.maximum(h1 + b1_ref[...], 0.0).astype(h1_ref.dtype)


def _layer2_kernel(tm, latent_dim, a_ref, h1_full_ref, invdeg_ref, eps_ref,
                   w2_ref, b2_ref, wd1_ref, bd1_ref, wd2_ref, bd2_ref, out_ref):
    """SplineConv-2 + reparameterize + MLP decoder for one tile of node rows.

    Writes one packed lane-dense slab per row: [mu | logvar | recon_x].
    """
    i = pl.multiple_of(pl.program_id(0) * tm, tm)
    a = a_ref[...].astype(jnp.float32).astype(jnp.bfloat16)      # int8 0/1 -> bf16
    ah = jnp.dot(a, h1_full_ref[...], preferred_element_type=jnp.float32)
    ah = ah * invdeg_ref[...]
    h1_tile = h1_full_ref[pl.ds(i, tm), :]
    cat = jnp.concatenate([ah.astype(jnp.bfloat16), h1_tile], axis=-1)
    h2 = jnp.dot(cat, w2_ref[...], preferred_element_type=jnp.float32)
    h2 = h2 + b2_ref[...]                                        # (tm, 2*latent) f32

    mu = h2[:, :latent_dim]
    logvar = h2[:, latent_dim:]
    z = mu + eps_ref[...] * jnp.exp(0.5 * logvar)                # reparameterize

    hd = jnp.dot(z.astype(jnp.bfloat16), wd1_ref[...],
                 preferred_element_type=jnp.float32)
    hd = jnp.maximum(hd + bd1_ref[...], 0.0)
    recon = jnp.dot(hd.astype(jnp.bfloat16), wd2_ref[...],
                    preferred_element_type=jnp.float32) + bd2_ref[...]

    out_ref[...] = jnp.concatenate([h2, recon], axis=-1)         # packed slab


# ------------------------------- wrapper --------------------------------------

def graph_vae_forward(x, edge_index, params, eps, latent_dim):
    """x: (N, C_in) f32, edge_index: (2, E) int32, eps: (N, latent_dim) f32.
    Returns (recon_x, mu, logvar) in f32, matching GraphVAE.forward."""
    n, c_in = x.shape
    hidden = params["w1_kernel"].shape[1]
    out_w = 2 * latent_dim + c_in

    a_budget, vmem_limit = _vmem_config()
    tm, n_pad = _choose_tile(n, a_budget)
    n_tiles = n_pad // tm

    # ---- glue (plain JAX): dense int8 adjacency + inverse in-degree ----------
    # A[i, j] = #edges j->i (message direction); mean-aggr = (A @ h) * (1/deg).
    # int8 counts are exact up to 127 parallel edges per (i, j) pair.
    # TODO(synk): for large sparse graphs replace the dense O(N^2) adjacency
    # with CSR neighbor lists + PrefetchScalarGridSpec gather aggregation.
    src, dst = edge_index[0], edge_index[1]
    adj = jnp.zeros((n_pad, n_pad), jnp.int8).at[dst, src].add(
        jnp.ones_like(dst, dtype=jnp.int8))
    deg = jnp.zeros((n_pad,), jnp.float32).at[dst].add(1.0)
    inv_deg = (1.0 / jnp.maximum(deg, 1.0))[:, None]             # (n_pad, 1) f32

    x_p = jnp.zeros((n_pad, c_in), jnp.bfloat16).at[:n].set(
        x.astype(jnp.bfloat16))
    eps_p = jnp.zeros((n_pad, latent_dim), jnp.float32).at[:n].set(eps)

    bf16 = lambda a: a.astype(jnp.bfloat16)
    w1 = bf16(jnp.concatenate([params["w1_kernel"], params["w1_root"]], axis=0))
    w2 = bf16(jnp.concatenate([params["w2_kernel"], params["w2_root"]], axis=0))
    wd1, wd2 = bf16(params["wd1"]), bf16(params["wd2"])
    b1, b2 = params["b1"], params["b2"]
    bd1, bd2 = params["bd1"], params["bd2"]

    row = lambda i: (i, 0)      # per-row-tile blocks (pipelined / double-buffered)

    cparams = pltpu.CompilerParams(
        dimension_semantics=("parallel",),
        vmem_limit_bytes=vmem_limit,
    )

    # ---- pass 1: h1 = relu(SplineConv1(x)) -----------------------------------
    cost1 = pl.CostEstimate(
        flops=2 * n_pad * n_pad * c_in + 2 * n_pad * (2 * c_in) * hidden,
        transcendentals=0,
        bytes_accessed=n_pad * n_pad                     # int8 adjacency
        + 2 * n_pad * c_in + 4 * n_pad + 2 * n_pad * hidden
        + 2 * (2 * c_in) * hidden + 4 * hidden,
    )
    h1 = pl.pallas_call(
        functools.partial(_layer1_kernel, tm),
        out_shape=jax.ShapeDtypeStruct((n_pad, hidden), jnp.bfloat16),
        grid=(n_tiles,),
        in_specs=[
            pl.BlockSpec((tm, n_pad), row),     # int8 A row tile (streamed)
            _vmem_resident(),                   # full x (agg RHS + root slice)
            pl.BlockSpec((tm, 1), row),         # 1/deg
            _vmem_resident(),                   # vstack([W1_k0, W1_root]) bf16
            _vmem_resident(),                   # b1 f32
        ],
        out_specs=pl.BlockSpec((tm, hidden), row),
        compiler_params=cparams,
        cost_estimate=cost1,
    )(adj, x_p, inv_deg, w1, b1)

    # ---- pass 2: SplineConv2 + reparameterize + decoder ----------------------
    cost2 = pl.CostEstimate(
        flops=2 * n_pad * n_pad * hidden
        + 2 * n_pad * (2 * hidden) * (2 * latent_dim)
        + 2 * n_pad * latent_dim * hidden + 2 * n_pad * hidden * c_in,
        transcendentals=n_pad * latent_dim,
        bytes_accessed=n_pad * n_pad                     # int8 adjacency
        + 2 * n_pad * hidden + 4 * n_pad + 4 * n_pad * latent_dim
        + 4 * n_pad * out_w
        + 2 * (2 * hidden) * (2 * latent_dim) + 2 * latent_dim * hidden
        + 2 * hidden * c_in + 4 * (2 * latent_dim + hidden + c_in),
    )
    packed = pl.pallas_call(
        functools.partial(_layer2_kernel, tm, latent_dim),
        out_shape=jax.ShapeDtypeStruct((n_pad, out_w), jnp.float32),
        grid=(n_tiles,),
        in_specs=[
            pl.BlockSpec((tm, n_pad), row),     # int8 A row tile (streamed)
            _vmem_resident(),                   # full h1 (agg RHS + root slice)
            pl.BlockSpec((tm, 1), row),         # 1/deg
            pl.BlockSpec((tm, latent_dim), row),  # eps
            _vmem_resident(),                   # vstack([W2_k0, W2_root]) bf16
            _vmem_resident(),                   # b2
            _vmem_resident(),                   # decoder_fc1 W^T
            _vmem_resident(),                   # decoder_fc1 b
            _vmem_resident(),                   # decoder_fc2 W^T
            _vmem_resident(),                   # decoder_fc2 b
        ],
        out_specs=pl.BlockSpec((tm, out_w), row),
        compiler_params=cparams,
        cost_estimate=cost2,
    )(adj, h1, inv_deg, eps_p, w2, b2, wd1, bd1, wd2, bd2)

    mu = packed[:n, :latent_dim]
    logvar = packed[:n, latent_dim:2 * latent_dim]
    recon = packed[:n, 2 * latent_dim:]
    return recon, mu, logvar


def init_params(key, in_channels, hidden_dim, latent_dim):
    """Deterministic synthetic parameters (shapes match the PyTorch module)."""
    ks = jax.random.split(key, 10)
    u = lambda k, shape, s=0.2: jax.random.uniform(k, shape, jnp.float32, -s, s)
    return {
        # SplineConv 1: kernel weight slice 0 (only active one with pseudo=0),
        # root weight, bias.
        "w1_kernel": u(ks[0], (in_channels, hidden_dim)),
        "w1_root":   u(ks[1], (in_channels, hidden_dim)),
        "b1":        u(ks[2], (1, hidden_dim)),
        # SplineConv 2
        "w2_kernel": u(ks[3], (hidden_dim, 2 * latent_dim)),
        "w2_root":   u(ks[4], (hidden_dim, 2 * latent_dim)),
        "b2":        u(ks[5], (1, 2 * latent_dim)),
        # decoder_fc1: Linear(latent_dim, hidden_dim)  (stored pre-transposed)
        "wd1":       u(ks[6], (latent_dim, hidden_dim)),
        "bd1":       u(ks[7], (1, hidden_dim)),
        # decoder_fc2: Linear(hidden_dim, in_channels)
        "wd2":       u(ks[8], (hidden_dim, in_channels)),
        "bd2":       u(ks[9], (1, in_channels)),
    }


def _reference_forward(x, edge_index, params, eps, latent_dim):
    """Pure-JAX f32 reference of the same forward pass."""
    n = x.shape[0]
    adj = jnp.zeros((n, n), jnp.float32).at[edge_index[1], edge_index[0]].add(1.0)
    a_norm = adj / jnp.maximum(jnp.sum(adj, axis=1, keepdims=True), 1.0)
    h1 = jax.nn.relu(a_norm @ (x @ params["w1_kernel"])
                     + x @ params["w1_root"] + params["b1"])
    h2 = (a_norm @ (h1 @ params["w2_kernel"])
          + h1 @ params["w2_root"] + params["b2"])
    mu, logvar = h2[:, :latent_dim], h2[:, latent_dim:]
    z = mu + eps * jnp.exp(0.5 * logvar)
    hd = jax.nn.relu(z @ params["wd1"] + params["bd1"])
    recon = hd @ params["wd2"] + params["bd2"]
    return recon, mu, logvar


if __name__ == "__main__":
    N_NODES = 16
    IN_CHANNELS = 4
    HIDDEN_DIM = 32
    LATENT_DIM = 8

    key = jax.random.PRNGKey(0)
    k_param, k_x, k_eps = jax.random.split(key, 3)

    params = init_params(k_param, IN_CHANNELS, HIDDEN_DIM, LATENT_DIM)

    # Node features
    x = jax.random.normal(k_x, (N_NODES, IN_CHANNELS), jnp.float32)

    # Simple bidirectional ring graph: edges i <-> (i+1) mod N
    idx = jnp.arange(N_NODES, dtype=jnp.int32)
    nxt = (idx + 1) % N_NODES
    edge_index = jnp.stack(
        [jnp.concatenate([idx, nxt]), jnp.concatenate([nxt, idx])], axis=0)

    # eps ~ N(0, I) for the reparameterization trick (randn_like in PyTorch)
    eps = jax.random.normal(k_eps, (N_NODES, LATENT_DIM), jnp.float32)

    recon_x, mu, logvar = graph_vae_forward(x, edge_index, params, eps, LATENT_DIM)
    jax.block_until_ready((recon_x, mu, logvar))

    assert recon_x.shape == (N_NODES, IN_CHANNELS)
    assert mu.shape == (N_NODES, LATENT_DIM)
    assert logvar.shape == (N_NODES, LATENT_DIM)

    # Correctness check against the pure-JAX f32 reference (bf16 MXU operands
    # in the kernel -> loose-ish tolerance).
    r_ref, m_ref, lv_ref = _reference_forward(x, edge_index, params, eps,
                                              LATENT_DIM)
    for got, ref in ((recon_x, r_ref), (mu, m_ref), (logvar, lv_ref)):
        assert jnp.allclose(got, ref, rtol=5e-2, atol=5e-2), float(
            jnp.max(jnp.abs(got - ref)))

    print("KERNEL_OK")
</pallas_src>

<mosaic_0001>
module attributes {stable_mosaic.version = 11 : i64} {
  func.func @_layer1_kernel(%arg0: i32, %arg1: memref<32x64xi8, #tpu.memory_space<vmem>>, %arg2: memref<64x4xbf16, #tpu.memory_space<vmem>>, %arg3: memref<32x1xf32, #tpu.memory_space<vmem>>, %arg4: memref<8x32xbf16, #tpu.memory_space<vmem>>, %arg5: memref<1x32xf32, #tpu.memory_space<vmem>>, %arg6: memref<32x32xbf16, #tpu.memory_space<vmem>>) attributes {dimension_semantics = [#tpu.dimension_semantics<parallel>], iteration_bounds = array<i64: 2>, scalar_prefetch = 0 : i64, scratch_operands = 0 : i64, tpu.core_type = #tpu.core_type<tc>, window_params = [{transform_indices = @transform_0, window_bounds = array<i64: 32, 64>}, {pipeline_mode = #tpu.pipeline_mode<synchronous>, transform_indices = @transform_1, window_bounds = array<i64: 64, 4>}, {transform_indices = @transform_2, window_bounds = array<i64: 32, 1>}, {pipeline_mode = #tpu.pipeline_mode<synchronous>, transform_indices = @transform_3, window_bounds = array<i64: 8, 32>}, {pipeline_mode = #tpu.pipeline_mode<synchronous>, transform_indices = @transform_4, window_bounds = array<i64: 1, 32>}, {transform_indices = @transform_5, window_bounds = array<i64: 32, 32>}]} {
    %c32_i32 = arith.constant 32 : i32
    %0 = arith.muli %arg0, %c32_i32 : i32
    %1 = tpu.assume_multiple %0, 32 : i32
    %c0 = arith.constant 0 : index
    %c0_0 = arith.constant 0 : index
    %2 = vector.load %arg1[%c0, %c0_0] : memref<32x64xi8, #tpu.memory_space<vmem>>, vector<32x64xi8>
    %3 = arith.sitofp %2 : vector<32x64xi8> to vector<32x64xf32>
    %4 = arith.truncf %3 : vector<32x64xf32> to vector<32x64xbf16>
    %c0_1 = arith.constant 0 : index
    %c0_2 = arith.constant 0 : index
    %5 = vector.load %arg2[%c0_1, %c0_2] : memref<64x4xbf16, #tpu.memory_space<vmem>>, vector<64x4xbf16>
    %cst = arith.constant dense<0.000000e+00> : vector<32x4xf32>
    %6 = tpu.matmul %4, %5, %cst {dimension_numbers = #tpu.dot_dimension_numbers<[1], [0], [0], [1], [0, 0, 1, 1], [], []>} : vector<32x64xbf16>, vector<64x4xbf16>, vector<32x4xf32> -> vector<32x4xf32>
    %c0_3 = arith.constant 0 : index
    %c0_4 = arith.constant 0 : index
    %7 = vector.load %arg3[%c0_3, %c0_4] : memref<32x1xf32, #tpu.memory_space<vmem>>, vector<32x1xf32>
    %8 = vector.broadcast %7 : vector<32x1xf32> to vector<32x4xf32>
    %9 = arith.mulf %6, %8 : vector<32x4xf32>
    %10 = arith.index_cast %1 : i32 to index
    %c0_5 = arith.constant 0 : index
    %11 = vector.load %arg2[%10, %c0_5] : memref<64x4xbf16, #tpu.memory_space<vmem>>, vector<32x4xbf16>
    %12 = arith.truncf %9 : vector<32x4xf32> to vector<32x4xbf16>
    %13 = tpu.concatenate %12, %11 in 1 : vector<32x4xbf16>, vector<32x4xbf16> -> vector<32x8xbf16>
    %c0_6 = arith.constant 0 : index
    %c0_7 = arith.constant 0 : index
    %14 = vector.load %arg4[%c0_6, %c0_7] : memref<8x32xbf16, #tpu.memory_space<vmem>>, vector<8x32xbf16>
    %cst_8 = arith.constant dense<0.000000e+00> : vector<32x32xf32>
    %15 = tpu.matmul %13, %14, %cst_8 {dimension_numbers = #tpu.dot_dimension_numbers<[1], [0], [0], [1], [0, 0, 1, 1], [], []>} : vector<32x8xbf16>, vector<8x32xbf16>, vector<32x32xf32> -> vector<32x32xf32>
    %c0_9 = arith.constant 0 : index
    %c0_10 = arith.constant 0 : index
    %16 = vector.load %arg5[%c0_9, %c0_10] : memref<1x32xf32, #tpu.memory_space<vmem>>, vector<1x32xf32>
    %17 = vector.broadcast %16 : vector<1x32xf32> to vector<32x32xf32>
    %18 = arith.addf %15, %17 : vector<32x32xf32>
    %cst_11 = arith.constant 0.000000e+00 : f32
    %19 = vector.broadcast %cst_11 : f32 to vector<32x32xf32>
    %20 = arith.maximumf %18, %19 : vector<32x32xf32>
    %21 = arith.truncf %20 : vector<32x32xf32> to vector<32x32xbf16>
    %c0_12 = arith.constant 0 : index
    %c0_13 = arith.constant 0 : index
    %22 = vector.load %arg6[%c0_12, %c0_13] : memref<32x32xbf16, #tpu.memory_space<vmem>>, vector<32x32xbf16>
    tpu.vector_store %arg6[%c0_12, %c0_13], %21 {strides = array<i32>} : memref<32x32xbf16, #tpu.memory_space<vmem>>, vector<32x32xbf16>,
    return
  }
  func.func @transform_0(%arg0: i32) -> (i32, i32) {
    %c0_i32 = arith.constant 0 : i32
    %c0_i32_0 = arith.constant 0 : i32
    return %arg0, %c0_i32 : i32, i32
  }
  func.func @transform_1(%arg0: i32) -> (i32, i32) {
    %c0_i32 = arith.constant 0 : i32
    %c0_i32_0 = arith.constant 0 : i32
    %c0_i32_1 = arith.constant 0 : i32
    return %c0_i32, %c0_i32_0 : i32, i32
  }
  func.func @transform_2(%arg0: i32) -> (i32, i32) {
    %c0_i32 = arith.constant 0 : i32
    %c0_i32_0 = arith.constant 0 : i32
    return %arg0, %c0_i32 : i32, i32
  }
  func.func @transform_3(%arg0: i32) -> (i32, i32) {
    %c0_i32 = arith.constant 0 : i32
    %c0_i32_0 = arith.constant 0 : i32
    %c0_i32_1 = arith.constant 0 : i32
    return %c0_i32, %c0_i32_0 : i32, i32
  }
  func.func @transform_4(%arg0: i32) -> (i32, i32) {
    %c0_i32 = arith.constant 0 : i32
    %c0_i32_0 = arith.constant 0 : i32
    %c0_i32_1 = arith.constant 0 : i32
    return %c0_i32, %c0_i32_0 : i32, i32
  }
  func.func @transform_5(%arg0: i32) -> (i32, i32) {
    %c0_i32 = arith.constant 0 : i32
    %c0_i32_0 = arith.constant 0 : i32
    return %arg0, %c0_i32 : i32, i32
  }
}

</mosaic_0001>

<llo_original>
// kernel: tpu_custom_call.1
$region0: #{tpu_custom_call.1}
  #allocation0 [shape = 'u32[]', space=smem, size = 0x4, offset = 0x4, fixed_abs, tag = 'smem constant byte address 0x4 - core index']
  #allocation1 [shape = 'u32[144,128]{1,0:T(1,128)}', space=vmem, size = 0x12000, scoped, tag = 'internal scratch']
  %s0 = inlined_call_operand.vmem [shape: s8[64,64], index: 0, kind: input, shape index: {}]
  %s1 = inlined_call_operand.vmem [shape: bf16[64,4], index: 1, kind: input, shape index: {}]
  %s2 = inlined_call_operand.vmem [shape: f32[64,1], index: 2, kind: input, shape index: {}]
  %s3 = inlined_call_operand.vmem [shape: bf16[8,32], index: 3, kind: input, shape index: {}]
  %s4 = inlined_call_operand.vmem [shape: f32[1,32], index: 4, kind: input, shape index: {}]
  %s5 = inlined_call_operand.vmem [shape: bf16[64,32], index: 5, kind: output, shape index: {}]
  %s6 = sld [smem:[#allocation0]]
  $region53: #{tpu_custom_call.1} parent=0
    _
  %s8 = ssub.s32 1, %s6
  %s9 = scalar_select 0, %s8, %s6
  loop: start=0, step=1, limit=4
  $region2: #{tpu_custom_call.1} parent=0 // loop_pre_header
    _
  $region3: #{tpu_custom_call.1} parent=0 // loop_header
    %s11 = sphi 0, %s15
    %p12 = scmp.ge.s32.totalorder %s11, 4
    %s21 = sphi 0, %s23
    %s24 = sphi 0, %s21
    %s25 = sphi 0, %s24
    %s41 = sphi 0, %s25
    %s45 = sphi 0, %s45
    %s47 = sphi 0, %s45
    %s48 = sphi 0, %s47
    %s62 = sphi 0, %s48
    %s68 = sphi 0, %s70
    %s71 = sphi 0, %s68
    %s72 = sphi 0, %s71
    %s88 = sphi 0, %s72
    %s92 = sphi 0, %s92
    %s94 = sphi 0, %s92
    %s95 = sphi 0, %s94
    %s109 = sphi 0, %s95
    %s113 = sphi 0, %s113
    %s115 = sphi 0, %s113
    %s116 = sphi 0, %s115
    %s130 = sphi 0, %s116
    %s136 = sphi 0, %s138
    %s139 = sphi 0, %s136
    %s140 = sphi 0, %s139
    %s156 = sphi 0, %s140
  $region4: #{tpu_custom_call.1} parent=0 // loop_header_branch
    %14 = sbr.rel (%p12) target = $region8
  $region5: #{tpu_custom_call.1} parent=0 // loop_body
    %s16 = ssub.s32 %s11, 1
    %s17 = ssub.s32 %s11, 2
    %s18 = sadd.s32 %s11, 1
    %s19 = ssub.s32 %s11, %s18
    %p20 = scmp.eq.s32.totalorder %s19, 0
    %s22 = sadd.s32 %s21, 1
    %s23 = scalar_select %p20, %s21, %s22
    %p26 = pneg %p20
    %p27 = scmp.eq.s32.totalorder %s11, 1
    %p28 = por %p26, %p27
    %p29 = scmp.ne.s32.totalorder %s21, %s24
    %p30 = scmp.eq.s32.totalorder %s11, 0
    %p31 = por %p29, %p30
    %p32 = scmp.ne.s32.totalorder %s21, %s24
    %p33 = scmp.eq.s32.totalorder %s16, 1
    %p34 = por %p32, %p33
    %p35 = scmp.ne.s32.totalorder %s24, %s25
    %p36 = scmp.eq.s32.totalorder %s16, 0
    %p37 = por %p35, %p36
    %p38 = scmp.ne.s32.totalorder %s24, %s25
    %p39 = scmp.eq.s32.totalorder %s17, 1
    %p40 = por %p38, %p39
    %p42 = scmp.ne.s32.totalorder %s25, %s41
    %p43 = scmp.eq.s32.totalorder %s17, 0
    %p44 = por %p42, %p43
    %s46 = sadd.s32 %s45, 1
    %p49 = scmp.eq.s32.totalorder %s11, 1
    %p50 = scmp.ne.s32.totalorder %s45, %s47
    %p51 = scmp.eq.s32.totalorder %s11, 0
    %p52 = por %p50, %p51
    %p53 = scmp.ne.s32.totalorder %s45, %s47
    %p54 = scmp.eq.s32.totalorder %s16, 1
    %p55 = por %p53, %p54
    %p56 = scmp.ne.s32.totalorder %s47, %s48
    %p57 = scmp.eq.s32.totalorder %s16, 0
    %p58 = por %p56, %p57
    %p59 = scmp.ne.s32.totalorder %s47, %s48
    %p60 = scmp.eq.s32.totalorder %s17, 1
    %p61 = por %p59, %p60
    %p63 = scmp.ne.s32.totalorder %s48, %s62
    %p64 = scmp.eq.s32.totalorder %s17, 0
    %p65 = por %p63, %p64
    %s66 = ssub.s32 %s11, %s18
    %p67 = scmp.eq.s32.totalorder %s66, 0
    %s69 = sadd.s32 %s68, 1
    %s70 = scalar_select %p67, %s68, %s69
    %p73 = pneg %p67
    %p74 = scmp.eq.s32.totalorder %s11, 1
    %p75 = por %p73, %p74
    %p76 = scmp.ne.s32.totalorder %s68, %s71
    %p77 = scmp.eq.s32.totalorder %s11, 0
    %p78 = por %p76, %p77
    %p79 = scmp.ne.s32.totalorder %s68, %s71
    %p80 = scmp.eq.s32.totalorder %s16, 1
    %p81 = por %p79, %p80
    %p82 = scmp.ne.s32.totalorder %s71, %s72
    %p83 = scmp.eq.s32.totalorder %s16, 0
    %p84 = por %p82, %p83
    %p85 = scmp.ne.s32.totalorder %s71, %s72
    %p86 = scmp.eq.s32.totalorder %s17, 1
    %p87 = por %p85, %p86
    %p89 = scmp.ne.s32.totalorder %s72, %s88
    %p90 = scmp.eq.s32.totalorder %s17, 0
    %p91 = por %p89, %p90
    %s93 = sadd.s32 %s92, 1
    %p96 = scmp.eq.s32.totalorder %s11, 1
    %p97 = scmp.ne.s32.totalorder %s92, %s94
    %p98 = scmp.eq.s32.totalorder %s11, 0
    %p99 = por %p97, %p98
    %p100 = scmp.ne.s32.totalorder %s92, %s94
    %p101 = scmp.eq.s32.totalorder %s16, 1
    %p102 = por %p100, %p101
    %p103 = scmp.ne.s32.totalorder %s94, %s95
    %p104 = scmp.eq.s32.totalorder %s16, 0
    %p105 = por %p103, %p104
    %p106 = scmp.ne.s32.totalorder %s94, %s95
    %p107 = scmp.eq.s32.totalorder %s17, 1
    %p108 = por %p106, %p107
    %p110 = scmp.ne.s32.totalorder %s95, %s109
    %p111 = scmp.eq.s32.totalorder %s17, 0
    %p112 = por %p110, %p111
    %s114 = sadd.s32 %s113, 1
    %p117 = scmp.eq.s32.totalorder %s11, 1
    %p118 = scmp.ne.s32.totalorder %s113, %s115
    %p119 = scmp.eq.s32.totalorder %s11, 0
    %p120 = por %p118, %p119
    %p121 = scmp.ne.s32.totalorder %s113, %s115
    %p122 = scmp.eq.s32.totalorder %s16, 1
    %p123 = por %p121, %p122
    %p124 = scmp.ne.s32.totalorder %s115, %s116
    %p125 = scmp.eq.s32.totalorder %s16, 0
    %p126 = por %p124, %p125
    %p127 = scmp.ne.s32.totalorder %s115, %s116
    %p128 = scmp.eq.s32.totalorder %s17, 1
    %p129 = por %p127, %p128
    %p131 = scmp.ne.s32.totalorder %s116, %s130
    %p132 = scmp.eq.s32.totalorder %s17, 0
    %p133 = por %p131, %p132
    %s134 = ssub.s32 %s11, %s18
    %p135 = scmp.eq.s32.totalorder %s134, 0
    %s137 = sadd.s32 %s136, 1
    %s138 = scalar_select %p135, %s136, %s137
    %p141 = pneg %p135
    %p142 = scmp.eq.s32.totalorder %s11, 1
    %p143 = por %p141, %p142
    %p144 = scmp.ne.s32.totalorder %s136, %s139
    %p145 = scmp.eq.s32.totalorder %s11, 0
    %p146 = por %p144, %p145
    %p147 = scmp.ne.s32.totalorder %s136, %s139
    %p148 = scmp.eq.s32.totalorder %s16, 1
    %p149 = por %p147, %p148
    %p150 = scmp.ne.s32.totalorder %s139, %s140
    %p151 = scmp.eq.s32.totalorder %s16, 0
    %p152 = por %p150, %p151
    %p153 = scmp.ne.s32.totalorder %s139, %s140
    %p154 = scmp.eq.s32.totalorder %s17, 1
    %p155 = por %p153, %p154
    %p157 = scmp.ne.s32.totalorder %s140, %s156
    %p158 = scmp.eq.s32.totalorder %s17, 0
    %p159 = por %p157, %p158
    %p160 = scmp.le.s32.totalorder 1, %s11
    %p161 = scmp.lt.s32.totalorder %s11, 3
    %p162 = pnand %p160, %p161
    %p163 = pneg %p162
    // Predicated region
    $region9: #{tpu_custom_call.1} parent=5 // pred_check
      _
    $region10: #{tpu_custom_call.1} parent=5 // pred_check_branch
      %165 = sbr.rel (%p162) target = $region12
    $region11: #{tpu_custom_call.1} parent=5 // pred_region
      %s166 = ssub.s32 %s11, 1
      // Predicated region
      $region13: #{tpu_custom_call.1} parent=11 // pred_check
        %p167 = pneg %p58
      $region14: #{tpu_custom_call.1} parent=11 // pred_check_branch
        %169 = sbr.rel (%p167) target = $region16
      $region15: #{tpu_custom_call.1} parent=11 // pred_region
        _
      $region16: #{tpu_custom_call.1} parent=11 // pred_fallthru
        _
      // Predicated region
      $region17: #{tpu_custom_call.1} parent=11 // pred_check
        %p170 = pneg %p105
      $region18: #{tpu_custom_call.1} parent=11 // pred_check_branch
        %172 = sbr.rel (%p170) target = $region20
      $region19: #{tpu_custom_call.1} parent=11 // pred_region
        _
      $region20: #{tpu_custom_call.1} parent=11 // pred_fallthru
        _
      // Predicated region
      $region21: #{tpu_custom_call.1} parent=11 // pred_check
        %p173 = pneg %p126
      $region22: #{tpu_custom_call.1} parent=11 // pred_check_branch
        %175 = sbr.rel (%p173) target = $region24
      $region23: #{tpu_custom_call.1} parent=11 // pred_region
        _
      $region24: #{tpu_custom_call.1} parent=11 // pred_fallthru
        _
    $region12: #{tpu_custom_call.1} parent=5 // pred_fallthru
      _
    %p176 = scmp.lt.s32.totalorder %s11, 2
    // Predicated region
    $region25: #{tpu_custom_call.1} parent=5 // pred_check
      %p177 = pneg %p176
    $region26: #{tpu_custom_call.1} parent=5 // pred_check_branch
      %179 = sbr.rel (%p177) target = $region28
    $region27: #{tpu_custom_call.1} parent=5 // pred_region
      // Predicated region
      $region29: #{tpu_custom_call.1} parent=27 // pred_check
        %p180 = pneg %p31
      $region30: #{tpu_custom_call.1} parent=27 // pred_check_branch
        %182 = sbr.rel (%p180) target = $region32
      $region31: #{tpu_custom_call.1} parent=27 // pred_region
        %p183 = scmp.lt.s32.totalorder %s11, 1
        %s184 = scalar_select %p183, %s11, 1
        %s185 = smul.addr %s184, 8
        %s186 = scalar_lea.vmem %s0, %s185
      $region32: #{tpu_custom_call.1} parent=27 // pred_fallthru
        _
      // Predicated region
      $region33: #{tpu_custom_call.1} parent=27 // pred_check
        %p187 = pneg %p78
      $region34: #{tpu_custom_call.1} parent=27 // pred_check_branch
        %189 = sbr.rel (%p187) target = $region36
      $region35: #{tpu_custom_call.1} parent=27 // pred_region
        %s190 = smul.u32 4, %s11
        %p191 = scmp.lt.s32.totalorder %s190, 7
        %s192 = scalar_select %p191, %s190, 7
        %s193 = smul.addr %s192, 8
        %s194 = scalar_lea.vmem %s2, %s193
        %s195 = smul.u32 4, %s11
      $region36: #{tpu_custom_call.1} parent=27 // pred_fallthru
        _
    $region28: #{tpu_custom_call.1} parent=5 // pred_fallthru
      _
    %p196 = scmp.le.s32.totalorder 1, %s11
    %p197 = scmp.lt.s32.totalorder %s11, 3
    %p198 = pnand %p196, %p197
    %p199 = pneg %p198
    // Predicated region
    $region37: #{tpu_custom_call.1} parent=5 // pred_check
      _
    $region38: #{tpu_custom_call.1} parent=5 // pred_check_branch
      %201 = sbr.rel (%p198) target = $region40
    $region39: #{tpu_custom_call.1} parent=5 // pred_region
      %s202 = ssub.s32 %s11, 1
      %p203 = scmp.lt.s32.totalorder %s16, 1
      %s204 = scalar_select %p203, %s16, 1
      %s205 = smul.addr %s204, 8
      %s206 = scalar_lea.vmem %s0, %s205
      %p207 = pneg %p37
      %p208 = pneg %p34
      %p209 = pneg %p58
      %p210 = pneg %p55
      %s211 = smul.u32 4, %s16
      %p212 = scmp.lt.s32.totalorder %s211, 7
      %s213 = scalar_select %p212, %s211, 7
      %s214 = smul.addr %s213, 8
      %s215 = scalar_lea.vmem %s2, %s214
      %p216 = pneg %p84
      %p217 = pneg %p81
      %p218 = pneg %p105
      %p219 = pneg %p102
      %p220 = pneg %p126
      %p221 = pneg %p123
      %p222 = pneg %p152
      %p223 = pneg %p149
      %s224 = smul.u32 4, %s16
      %p225 = scmp.lt.s32.totalorder %s224, 7
      %s226 = scalar_select %p225, %s224, 7
      %s227 = smul.addr %s226, 4
      %s228 = scalar_lea.vmem %s5, %s227
      %p229 = scmp.lt.s32.totalorder %s16, 1
      %s230 = scalar_select %p229, %s16, 1
      %s231 = smul.addr %s230, 8
      %s232 = scalar_lea.vmem %s0, %s231
      %s233 = smul.u32 4, %s16
      %p234 = scmp.lt.s32.totalorder %s233, 7
      %s235 = scalar_select %p234, %s233, 7
      %s236 = smul.addr %s235, 8
      %s237 = scalar_lea.vmem %s2, %s236
      %s238 = smul.u32 4, %s16
      %s239 = smul.u32 4, %s16
      %p240 = scmp.lt.s32.totalorder %s239, 7
      %s241 = scalar_select %p240, %s239, 7
      %s242 = smul.addr %s241, 4
      %s243 = scalar_lea.vmem %s5, %s242
      %s244 = smul.u32 4, %s16
      %s246 = smul.u32 %s16, 32
      %v247 = vld [vmem:[%s232] sm:$0xff]
      %v248 = vunpack.c.l.s8.bf16 %v247
      %v249 = vunpack.c.h.s8.bf16 %v247
      %v250 = vld [vmem:[%s1] sm:$0xf]
      %v251 = vld [vmem:[%s1 + $0x4] sm:$0xf]
      %v252 = vld [vmem:[%s1 + $0x8] sm:$0xf]
      %v253 = vld [vmem:[%s1 + $0xc] sm:$0xf]
      %v254 = vld [vmem:[%s1 + $0x10] sm:$0xf]
      %v255 = vld [vmem:[%s1 + $0x14] sm:$0xf]
      %v256 = vld [vmem:[%s1 + $0x18] sm:$0xf]
      %v257 = vld [vmem:[%s1 + $0x1c] sm:$0xf]
      %v266 = vunpack.c.l.b16 %v250
      %v267 = vunpack.c.l.b16 %v251
      %v268 = vunpack.c.l.b16 %v252
      %v269 = vunpack.c.l.b16 %v253
      %v270 = vunpack.c.l.b16 %v254
      %v271 = vunpack.c.l.b16 %v255
      %v272 = vunpack.c.l.b16 %v256
      %v273 = vunpack.c.l.b16 %v257
      %v274 = vpack.c.b16 %v267, %v266
      %v275 = vpack.c.b16 %v269, %v268
      %v276 = vpack.c.b16 %v271, %v270
      %v277 = vpack.c.b16 %v273, %v272
      %vm282 = vcmask 523264
      %v284 = vsel %vm282, %v248, 0
      %v287 = vsel %vm282, %v249, 0
      %289 = vmatprep.subr.bf16.mxu0 0
      %290 = vmatpush1.bf16.msra.mxu0 0
      %291 = vmatprep.subr.bf16.mxu0 0
      %292 = vmatpush1.bf16.msra.mxu0 0
      %293 = vmatprep.subr.bf16.mxu0 0
      %294 = vmatpush1.bf16.msra.mxu0 0
      %295 = vmatprep.subr.bf16.mxu0 0
      %296 = vmatpush1.bf16.msra.mxu0 0
      %297 = vmatprep.subr.bf16.mxu0 0
      %298 = vmatpush1.bf16.msra.mxu0 %v277
      %299 = vmatprep.subr.bf16.mxu0 0
      %300 = vmatpush1.bf16.msra.mxu0 %v276
      %301 = vmatprep.subr.bf16.mxu0 0
      %302 = vmatpush1.bf16.msra.mxu0 %v275
      %303 = vmatprep.subr.bf16.mxu0 0
      %304 = vmatpush1.bf16.msra.mxu0 %v274
      %305 = vmatprep.subr.bf16.mxu0 0
      %306 = vmatpush2.bf16.msra.mxu0 0
      %307 = vmatprep.subr.bf16.mxu0 0
      %308 = vmatpush2.bf16.msra.mxu0 0
      %309 = vmatprep.subr.bf16.mxu0 0
      %310 = vmatpush2.bf16.msra.mxu0 0
      %311 = vmatprep.subr.bf16.mxu0 0
      %312 = vmatpush2.bf16.msra.mxu0 0
      %313 = vmatprep.subr.bf16.mxu0 0
      %314 = vmatpush2.bf16.msra.mxu0 0
      %315 = vmatprep.subr.bf16.mxu0 0
      %316 = vmatpush2.bf16.msra.mxu0 0
      %317 = vmatprep.subr.bf16.mxu0 0
      %318 = vmatpush2.bf16.msra.mxu0 0
      %319 = vmatprep.subr.bf16.mxu0 0
      %320 = vmatpush2.bf16.msra.mxu0 0
      %321 = vmatprep.mubr.bf16.mxu0 0
      %322 = vmatmul.mubr.bf16.gmra.mxu0 %v284
      %v323 = vpop.f32.mrf.mxu0
      %v324 = vadd.f32 0.0, %v323
      %v325 = vpop.f32.mrf.mxu0
      %v326 = vpop.f32.mrf.mxu0
      %v327 = vadd.f32 0.0, %v326
      %v328 = vpop.f32.mrf.mxu0
      %329 = vmatprep.mubr.bf16.mxu0 0
      %330 = vmatmul.mubr.bf16.gmra.mxu0 %v287
      %v331 = vpop.f32.mrf.mxu0
      %v332 = vadd.f32 0.0, %v331
      %v333 = vpop.f32.mrf.mxu0
      %v334 = vpop.f32.mrf.mxu0
      %v335 = vadd.f32 0.0, %v334
      %v336 = vpop.f32.mrf.mxu0
      %337 = vdwg.mxu0
      %v338 = vld [vmem:[%s237] sm:$0xff]
      %v339 = vld [vmem:[%s237 + $0x8] sm:$0xff]
      %v340 = vld [vmem:[%s237 + $0x10] sm:$0xff]
      %v341 = vld [vmem:[%s237 + $0x18] sm:$0xff]
      %343 = vset.pattern.permute.xlu0 0
      %344 = vperm.xlu0 %343, %v338
      %v345 = vpop.permute.xlu0 %344
      %348 = vset.pattern.permute.xlu0 0
      %349 = vperm.xlu0 %348, %v339
      %v350 = vpop.permute.xlu0 %349
      %353 = vset.pattern.permute.xlu0 0
      %354 = vperm.xlu0 %353, %v340
      %v355 = vpop.permute.xlu0 %354
      %358 = vset.pattern.permute.xlu0 0
      %359 = vperm.xlu0 %358, %v341
      %v360 = vpop.permute.xlu0 %359
      %v362 = vmul.f32 %v324, %v345
      %v363 = vmul.f32 %v327, %v350
      %v364 = vmul.f32 %v332, %v355
      %v365 = vmul.f32 %v335, %v360
      %s366 = sshra.s32 %s246, 3
      %s367 = sand.u32 %s246, 7
      %s368 = smul.addr %s366, 4
      %s369 = scalar_lea.vmem %s1, %s368
      %v370 = vld [vmem:[%s369] sm:$0xf]
      %v371 = vld [vmem:[%s369 + $0x4] sm:$0xf]
      %v372 = vld [vmem:[%s369 + $0x8] sm:$0xf]
      %v373 = vld [vmem:[%s369 + $0xc] sm:$0xf]
      %v374 = vpack.c.bf16 %v363, %v362
      %v375 = vpack.c.bf16 %v365, %v364
      %v380 = vunpack.c.l.b16 %v370
      %v381 = vunpack.c.l.b16 %v371
      %v382 = vunpack.c.l.b16 %v372
      %v383 = vunpack.c.l.b16 %v373
      %v384 = vpack.c.b16 %v381, %v380
      %v385 = vpack.c.b16 %v383, %v382
      %386 = vrot.lane.b32.xlu0 %v384, 4
      %v387 = vpop.permute.xlu0 %386
      %388 = vrot.lane.b32.xlu0 %v385, 4
      %v389 = vpop.permute.xlu0 %388
      %vm390 = vcmask 31744
      %v393 = vsel %vm390, %v374, %v387
      %v396 = vsel %vm390, %v375, %v389
      %v397 = vld [vmem:[%s3] sm:$0xf]
      %v398 = vld [vmem:[%s4] sm:$0x1]
      %v400 = vlaneseq
      %v401 = vshrl.u32 %v400, 7
      %v402 = vsub.s32 0, %v401
      %v403 = vrot.slane %v398, %v402
      %vm405 = vcmask 64512
      %v406 = vsel %vm405, %v393, 0
      %v408 = vsel %vm405, %v396, 0
      %vm410 = vcmask 1043456
      %v412 = vsel %vm410, %v397, 0
      %414 = vmatprep.subr.bf16.mxu0 0
      %415 = vmatpush1.bf16.msra.mxu0 0
      %416 = vmatprep.subr.bf16.mxu0 0
      %417 = vmatpush1.bf16.msra.mxu0 0
      %418 = vmatprep.subr.bf16.mxu0 0
      %419 = vmatpush1.bf16.msra.mxu0 0
      %420 = vmatprep.subr.bf16.mxu0 0
      %421 = vmatpush1.bf16.msra.mxu0 0
      %422 = vmatprep.subr.bf16.mxu0 0
      %423 = vmatpush1.bf16.msra.mxu0 0
      %424 = vmatprep.subr.bf16.mxu0 0
      %425 = vmatpush1.bf16.msra.mxu0 0
      %426 = vmatprep.subr.bf16.mxu0 0
      %427 = vmatpush1.bf16.msra.mxu0 0
      %428 = vmatprep.subr.bf16.mxu0 0
      %429 = vmatpush1.bf16.msra.mxu0 %v412
      %430 = vmatprep.subr.bf16.mxu0 0
      %431 = vmatpush2.bf16.msra.mxu0 0
      %432 = vmatprep.subr.bf16.mxu0 0
      %433 = vmatpush2.bf16.msra.mxu0 0
      %434 = vmatprep.subr.bf16.mxu0 0
      %435 = vmatpush2.bf16.msra.mxu0 0
      %436 = vmatprep.subr.bf16.mxu0 0
      %437 = vmatpush2.bf16.msra.mxu0 0
      %438 = vmatprep.subr.bf16.mxu0 0
      %439 = vmatpush2.bf16.msra.mxu0 0
      %440 = vmatprep.subr.bf16.mxu0 0
      %441 = vmatpush2.bf16.msra.mxu0 0
      %442 = vmatprep.subr.bf16.mxu0 0
      %443 = vmatpush2.bf16.msra.mxu0 0
      %444 = vmatprep.subr.bf16.mxu0 0
      %445 = vmatpush2.bf16.msra.mxu0 0
      %446 = vmatprep.mubr.bf16.mxu0 0
      %447 = vmatmul.mubr.bf16.gmra.mxu0 %v406
      %v448 = vpop.f32.mrf.mxu0
      %v449 = vadd.f32 %v403, %v448
      %v450 = vpop.f32.mrf.mxu0
      %v451 = vpop.f32.mrf.mxu0
      %v452 = vadd.f32 %v403, %v451
      %v453 = vpop.f32.mrf.mxu0
      %454 = vmatprep.mubr.bf16.mxu0 0
      %455 = vmatmul.mubr.bf16.gmra.mxu0 %v408
      %v456 = vpop.f32.mrf.mxu0
      %v457 = vadd.f32 %v403, %v456
      %v458 = vpop.f32.mrf.mxu0
      %v459 = vpop.f32.mrf.mxu0
      %v460 = vadd.f32 %v403, %v459
      %v461 = vpop.f32.mrf.mxu0
      %462 = vdwg.mxu0
      %v463 = vmax.f32 %v449, 0.0
      %v464 = vmax.f32 %v452, 0.0
      %v465 = vmax.f32 %v457, 0.0
      %v466 = vmax.f32 %v460, 0.0
      %v467 = vpack.c.bf16 %v464, %v463
      %v468 = vpack.c.bf16 %v466, %v465
      %v471 = vunpack.c.l.b16 %v467
      %v472 = vunpack.c.h.b16 %v467
      %v473 = vunpack.c.l.b16 %v468
      %v474 = vunpack.c.h.b16 %v468
      %v475 = vpack.c.b16 %v471, %v471
      %v476 = vpack.c.b16 %v472, %v472
      %v477 = vpack.c.b16 %v473, %v473
      %v478 = vpack.c.b16 %v474, %v474
      %vm483 = vcmask 257024
      %484 = vst.msk [vmem:[%s243] sm:$0xf] %vm483, %v475
      %485 = vst.msk [vmem:[%s243 + $0x4] sm:$0xf] %vm483, %v476
      %486 = vst.msk [vmem:[%s243 + $0x8] sm:$0xf] %vm483, %v477
      %487 = vst.msk [vmem:[%s243 + $0xc] sm:$0xf] %vm483, %v478
      %s488 = smul.u32 4, %s16
      %p489 = scmp.lt.s32.totalorder %s488, 7
      %s490 = scalar_select %p489, %s488, 7
      %s491 = smul.addr %s490, 4
      %s492 = scalar_lea.vmem %s5, %s491
      // Predicated region
      $region41: #{tpu_custom_call.1} parent=39 // pred_check
        %p493 = pneg %p149
      $region42: #{tpu_custom_call.1} parent=39 // pred_check_branch
        %495 = sbr.rel (%p493) target = $region44
      $region43: #{tpu_custom_call.1} parent=39 // pred_region
        %s496 = smul.u32 4, %s16
      $region44: #{tpu_custom_call.1} parent=39 // pred_fallthru
        _
    $region40: #{tpu_custom_call.1} parent=5 // pred_fallthru
      _
    %p497 = scmp.le.s32.totalorder 2, %s11
    // Predicated region
    $region45: #{tpu_custom_call.1} parent=5 // pred_check
      %p498 = pneg %p497
    $region46: #{tpu_custom_call.1} parent=5 // pred_check_branch
      %500 = sbr.rel (%p498) target = $region48
    $region47: #{tpu_custom_call.1} parent=5 // pred_region
      %s501 = ssub.s32 %s11, 2
      // Predicated region
      $region49: #{tpu_custom_call.1} parent=47 // pred_check
        %p502 = pneg %p155
      $region50: #{tpu_custom_call.1} parent=47 // pred_check_branch
        %504 = sbr.rel (%p502) target = $region52
      $region51: #{tpu_custom_call.1} parent=47 // pred_region
        %s505 = smul.u32 4, %s17
        %p506 = scmp.lt.s32.totalorder %s505, 7
        %s507 = scalar_select %p506, %s505, 7
        %s508 = smul.addr %s507, 4
        %s509 = scalar_lea.vmem %s5, %s508
      $region52: #{tpu_custom_call.1} parent=47 // pred_fallthru
        _
    $region48: #{tpu_custom_call.1} parent=5 // pred_fallthru
      _
  $region6: #{tpu_custom_call.1} parent=0 // loop_footer
    %s15 = sadd.s32 1, %s11
  $region7: #{tpu_custom_call.1} parent=0 // loop_footer_branch
    %10 = sbr.rel target = $region3
  $region8: #{tpu_custom_call.1} parent=0 // loop_exit
    _

</llo_original>
